<compile_context>
chip_gen: v7x
topology: tpu7x:2x2x1
jax: 0.10.0
libtpu: 0.0.40
codegen_flags: <defaults>
</compile_context>

<pallas_src>
import functools

import jax
import jax.numpy as jnp
from jax.experimental import pallas as pl
from jax.experimental.pallas import tpu as pltpu


def _vlayernorm_kernel(x_ref, g_ref, b_ref, o_ref, *, eps: float):
    # x_ref: (t_b, C, T)   g_ref / b_ref: (1, C, 1)   o_ref: (t_b, C, T)
    x = x_ref[...].astype(jnp.float32)
    g = g_ref[...].astype(jnp.float32)
    b = b_ref[...].astype(jnp.float32)

    # Per-(batch, spatial-column) statistics over the channel (sublane) axis.
    mean = jnp.mean(x, axis=1, keepdims=True)                              # (t_b, 1, T)
    var = jnp.mean(jnp.square(x - mean), axis=1, keepdims=True)            # biased (unbiased=False)
    inv_std = jax.lax.rsqrt(var + eps)                                     # EUP, (t_b, 1, T)

    # Single fused normalize + affine: y = (x - mean) * (g * inv_std) + b
    o_ref[...] = ((x - mean) * (g * inv_std) + b).astype(o_ref.dtype)


def _pick_tiles(b: int, c: int, hw: int, *, budget_bytes: int = 4 * 1024 * 1024):
    """Pick (t_b, t_hw) so each block is ~budget_bytes at f32 accounting.

    f32 accounting (4 B/elem) is used regardless of input dtype because the kernel
    upcasts to f32 for the stats / normalize path (mandatory on v5e, safe everywhere).
    """
    bytes_per_col = 4 * max(1, c)
    budget_cols = max(128, (budget_bytes // bytes_per_col) // 128 * 128)

    if hw > budget_cols:
        # Tile the spatial axis only (batch tile = 1). Prefer a 128-aligned divisor
        # of HW that is >= cap/2 (no ragged tail); otherwise keep the full-size tile
        # and accept one masked ragged tail tile.
        cap = budget_cols
        t_hw = cap
        t = cap
        while t >= max(128, cap // 2):
            if hw % t == 0:
                t_hw = t
                break
            t -= 128
        return 1, t_hw

    # Whole spatial extent fits in one block -> grow along the batch axis instead.
    # (Reduction stays strictly on axis=1 inside the kernel, so batches never mix.)
    t_hw = hw
    t_b = max(1, min(b, budget_cols // max(1, hw)))
    if t_b >= b and b > 1:
        # Keep >= 2 grid steps so v7x's second TensorCore gets work.
        t_b = pl.cdiv(b, 2)
    # Prefer a batch tile that divides B (accept down to half the target size);
    # otherwise keep t_b and eat one ragged tail block.
    for t in range(t_b, max(0, t_b // 2), -1):
        if b % t == 0:
            t_b = t
            break
    return t_b, t_hw


def vlayernorm(x: jax.Array, g: jax.Array, b: jax.Array, eps: float = 1e-5) -> jax.Array:
    """x: (B, C, H, W) NCHW.  g, b: (1, C, 1, 1) affine parameters."""
    B, C, H, W = x.shape
    HW = H * W
    x3 = x.reshape(B, C, HW)
    g3 = g.reshape(1, C, 1)
    b3 = b.reshape(1, C, 1)

    t_b, t_hw = _pick_tiles(B, C, HW)
    grid = (pl.cdiv(B, t_b), pl.cdiv(HW, t_hw))
    # TODO(synk): if HW is not a multiple of 128 and smaller than the budget, stores
    # are masked (vst.msk); padding HW in the wrapper could recover lane-dense stores.

    out = pl.pallas_call(
        functools.partial(_vlayernorm_kernel, eps=eps),
        out_shape=jax.ShapeDtypeStruct((B, C, HW), x.dtype),
        grid_spec=pltpu.PrefetchScalarGridSpec(
            num_scalar_prefetch=0,
            grid=grid,
            in_specs=[
                pl.BlockSpec((t_b, C, t_hw), lambda i, j: (i, 0, j)),
                pl.BlockSpec((1, C, 1), lambda i, j: (0, 0, 0)),   # g stays resident
                pl.BlockSpec((1, C, 1), lambda i, j: (0, 0, 0)),   # b stays resident
            ],
            out_specs=pl.BlockSpec((t_b, C, t_hw), lambda i, j: (i, 0, j)),
        ),
        compiler_params=pltpu.CompilerParams(
            dimension_semantics=("parallel", "parallel"),
            vmem_limit_bytes=48 * 1024 * 1024,
        ),
    )(x3, g3, b3)

    return out.reshape(B, C, H, W)


def vlayernorm_ref(x, g, b, eps=1e-5):
    mean = jnp.mean(x, axis=1, keepdims=True)
    var = jnp.mean((x - mean) ** 2, axis=1, keepdims=True)  # unbiased=False
    return (x - mean) / jnp.sqrt(var + eps) * g + b


if __name__ == "__main__":
    key = jax.random.PRNGKey(0)
    B, C, H, W = 2, 4, 16, 16
    x = jax.random.normal(key, (B, C, H, W), dtype=jnp.float32)

    # Parameters initialized exactly as the nn.Module.__init__: ones / zeros.
    g = jnp.ones((1, C, 1, 1), dtype=jnp.float32)
    b = jnp.zeros((1, C, 1, 1), dtype=jnp.float32)

    out = vlayernorm(x, g, b, eps=1e-5)
    out = jax.block_until_ready(out)

    ref = vlayernorm_ref(x, g, b, eps=1e-5)
    assert out.shape == (B, C, H, W)
    assert jnp.allclose(out, ref, atol=1e-5, rtol=1e-5), "mismatch vs reference"

    print("KERNEL_OK")
</pallas_src>

<mosaic_0001>
module attributes {stable_mosaic.version = 11 : i64} {
  func.func @_vlayernorm_kernel(%arg0: i32, %arg1: i32, %arg2: memref<1x4x256xf32, #tpu.memory_space<vmem>>, %arg3: memref<1x4x1xf32, #tpu.memory_space<vmem>>, %arg4: memref<1x4x1xf32, #tpu.memory_space<vmem>>, %arg5: memref<1x4x256xf32, #tpu.memory_space<vmem>>) attributes {dimension_semantics = [#tpu.dimension_semantics<parallel>, #tpu.dimension_semantics<parallel>], iteration_bounds = array<i64: 2, 1>, scalar_prefetch = 0 : i64, scratch_operands = 0 : i64, tpu.core_type = #tpu.core_type<tc>, window_params = [{transform_indices = @transform_0, window_bounds = array<i64: 1, 4, 256>}, {pipeline_mode = #tpu.pipeline_mode<synchronous>, transform_indices = @transform_1, window_bounds = array<i64: 1, 4, 1>}, {pipeline_mode = #tpu.pipeline_mode<synchronous>, transform_indices = @transform_2, window_bounds = array<i64: 1, 4, 1>}, {transform_indices = @transform_3, window_bounds = array<i64: 1, 4, 256>}]} {
    %c0 = arith.constant 0 : index
    %c0_0 = arith.constant 0 : index
    %c0_1 = arith.constant 0 : index
    %0 = vector.load %arg2[%c0, %c0_0, %c0_1] : memref<1x4x256xf32, #tpu.memory_space<vmem>>, vector<1x4x256xf32>
    %c0_2 = arith.constant 0 : index
    %c0_3 = arith.constant 0 : index
    %c0_4 = arith.constant 0 : index
    %1 = vector.load %arg3[%c0_2, %c0_3, %c0_4] : memref<1x4x1xf32, #tpu.memory_space<vmem>>, vector<1x4x1xf32>
    %c0_5 = arith.constant 0 : index
    %c0_6 = arith.constant 0 : index
    %c0_7 = arith.constant 0 : index
    %2 = vector.load %arg4[%c0_5, %c0_6, %c0_7] : memref<1x4x1xf32, #tpu.memory_space<vmem>>, vector<1x4x1xf32>
    %cst = arith.constant dense<0.000000e+00> : vector<1x256xf32>
    %3 = vector.multi_reduction <add>, %0, %cst [1] : vector<1x4x256xf32> to vector<1x256xf32>
    %4 = vector.shape_cast %3 : vector<1x256xf32> to vector<1x1x256xf32>
    %cst_8 = arith.constant 4.000000e+00 : f32
    %5 = vector.broadcast %cst_8 : f32 to vector<1x1x256xf32>
    %6 = arith.divf %4, %5 : vector<1x1x256xf32>
    %7 = vector.broadcast %6 : vector<1x1x256xf32> to vector<1x4x256xf32>
    %8 = arith.subf %0, %7 : vector<1x4x256xf32>
    %9 = arith.mulf %8, %8 : vector<1x4x256xf32>
    %cst_9 = arith.constant dense<0.000000e+00> : vector<1x256xf32>
    %10 = vector.multi_reduction <add>, %9, %cst_9 [1] : vector<1x4x256xf32> to vector<1x256xf32>
    %11 = vector.shape_cast %10 : vector<1x256xf32> to vector<1x1x256xf32>
    %cst_10 = arith.constant 4.000000e+00 : f32
    %12 = vector.broadcast %cst_10 : f32 to vector<1x1x256xf32>
    %13 = arith.divf %11, %12 : vector<1x1x256xf32>
    %cst_11 = arith.constant 9.99999974E-6 : f32
    %14 = vector.broadcast %cst_11 : f32 to vector<1x1x256xf32>
    %15 = arith.addf %13, %14 : vector<1x1x256xf32>
    %16 = math.rsqrt %15 : vector<1x1x256xf32>
    %17 = vector.broadcast %6 : vector<1x1x256xf32> to vector<1x4x256xf32>
    %18 = arith.subf %0, %17 : vector<1x4x256xf32>
    %19 = vector.broadcast %1 : vector<1x4x1xf32> to vector<1x4x256xf32>
    %20 = vector.broadcast %16 : vector<1x1x256xf32> to vector<1x4x256xf32>
    %21 = arith.mulf %19, %20 : vector<1x4x256xf32>
    %22 = arith.mulf %18, %21 : vector<1x4x256xf32>
    %23 = vector.broadcast %2 : vector<1x4x1xf32> to vector<1x4x256xf32>
    %24 = arith.addf %22, %23 : vector<1x4x256xf32>
    %c0_12 = arith.constant 0 : index
    %c0_13 = arith.constant 0 : index
    %c0_14 = arith.constant 0 : index
    %25 = vector.load %arg5[%c0_12, %c0_13, %c0_14] : memref<1x4x256xf32, #tpu.memory_space<vmem>>, vector<1x4x256xf32>
    tpu.vector_store %arg5[%c0_12, %c0_13, %c0_14], %24 {strides = array<i32>} : memref<1x4x256xf32, #tpu.memory_space<vmem>>, vector<1x4x256xf32>,
    return
  }
  func.func @transform_0(%arg0: i32, %arg1: i32) -> (i32, i32, i32) {
    %c0_i32 = arith.constant 0 : i32
    %c0_i32_0 = arith.constant 0 : i32
    return %arg0, %c0_i32, %arg1 : i32, i32, i32
  }
  func.func @transform_1(%arg0: i32, %arg1: i32) -> (i32, i32, i32) {
    %c0_i32 = arith.constant 0 : i32
    %c0_i32_0 = arith.constant 0 : i32
    %c0_i32_1 = arith.constant 0 : i32
    %c0_i32_2 = arith.constant 0 : i32
    return %c0_i32, %c0_i32_0, %c0_i32_1 : i32, i32, i32
  }
  func.func @transform_2(%arg0: i32, %arg1: i32) -> (i32, i32, i32) {
    %c0_i32 = arith.constant 0 : i32
    %c0_i32_0 = arith.constant 0 : i32
    %c0_i32_1 = arith.constant 0 : i32
    %c0_i32_2 = arith.constant 0 : i32
    return %c0_i32, %c0_i32_0, %c0_i32_1 : i32, i32, i32
  }
  func.func @transform_3(%arg0: i32, %arg1: i32) -> (i32, i32, i32) {
    %c0_i32 = arith.constant 0 : i32
    %c0_i32_0 = arith.constant 0 : i32
    return %arg0, %c0_i32, %arg1 : i32, i32, i32
  }
}

</mosaic_0001>

<llo_original>
// kernel: tpu_custom_call.1
$region0: #{tpu_custom_call.1}
  #allocation0 [shape = 'u32[]', space=smem, size = 0x4, offset = 0x4, fixed_abs, tag = 'smem constant byte address 0x4 - core index']
  #allocation1 [shape = 'u32[144,128]{1,0:T(1,128)}', space=vmem, size = 0x12000, scoped, tag = 'internal scratch']
  %s0 = inlined_call_operand.hbm [shape: f32[2,4,256], index: 0, kind: input, shape index: {}]
  %s1 = inlined_call_operand.vmem [shape: f32[1,4,1], index: 1, kind: input, shape index: {}]
  %s2 = inlined_call_operand.vmem [shape: f32[1,4,1], index: 2, kind: input, shape index: {}]
  %s3 = inlined_call_operand.hbm [shape: f32[2,4,256], index: 3, kind: output, shape index: {}]
  %s4 = sld [smem:[#allocation0]]
  $region49: #{tpu_custom_call.1} parent=0
    _
  %s6 = ssub.s32 1, %s4
  %s7 = scalar_select 0, %s6, %s4
  $region1: #{tpu_custom_call.1} parent=0
    #allocation2 [shape = 'u8[8192]{0}', space=vmem, size = 0x2000, scoped, tag = 'input window, operand 0']
    #allocation3 [shape = 's32[2]{0}', space=sflag, size = 0x8, scoped, tag = 'scoped memory for tpu_custom_call.1']
    #allocation4 [shape = 's32[2]{0}', space=sflag, size = 0x8, scoped, tag = 'scoped memory for tpu_custom_call.1']
    #allocation5 [shape = 'u8[8192]{0}', space=vmem, size = 0x2000, scoped, tag = 'output window, operand 0']
    %8 = vsyncpa [#allocation3], 0
    %s9 = scalar_lea.sflag [#allocation3], 1
    %10 = vsyncpa %s9, 0
    %11 = vsyncpa [#allocation4], 0
    %s12 = scalar_lea.sflag [#allocation4], 1
    %13 = vsyncpa %s12, 0
    loop: start=0, step=1, limit=4
    $region2: #{tpu_custom_call.1} parent=1 // loop_pre_header
      _
    $region3: #{tpu_custom_call.1} parent=1 // loop_header
      %s15 = sphi 0, %s19
      %p16 = scmp.ge.s32.totalorder %s15, 4
      %s22 = sphi 0, %s34
      %s23 = sphi 0, %s30
      %s24 = sphi 0, %s22
      %s25 = sphi 0, %s23
      %s26 = sphi 0, %s24
      %s27 = sphi 0, %s25
      %s39 = sphi 0, %s41
      %s42 = sphi 0, %s39
      %s43 = sphi 0, %s42
      %s59 = sphi 0, %s43
      %s63 = sphi 0, %s63
      %s65 = sphi 0, %s63
      %s66 = sphi 0, %s65
      %s80 = sphi 0, %s66
      %s84 = sphi 0, %s84
      %s86 = sphi 0, %s84
      %s87 = sphi 0, %s86
      %s101 = sphi 0, %s87
      %s109 = sphi 0, %s111
      %s112 = sphi 0, %s109
      %s113 = sphi 0, %s112
      %s129 = sphi 0, %s113
    $region4: #{tpu_custom_call.1} parent=1 // loop_header_branch
      %18 = sbr.rel (%p16) target = $region8
    $region5: #{tpu_custom_call.1} parent=1 // loop_body
      %s20 = ssub.s32 %s15, 1
      %s21 = ssub.s32 %s15, 2
      %s28 = sadd.s32 1, %s23
      %p29 = scmp.ge.s32.totalorder %s28, 1
      %s30 = scalar_select %p29, 0, %s28
      %s31 = sadd.s32 1, %s22
      %s32 = scalar_select %p29, %s31, %s22
      %p33 = scmp.ge.s32.totalorder %s32, 2
      %s34 = scalar_select %p33, 0, %s32
      %s35 = ssub.s32 %s22, %s34
      %s36 = ssub.s32 %s23, %s30
      %s37 = sor.u32 %s35, %s36
      %p38 = scmp.eq.s32.totalorder %s37, 0
      %s40 = sadd.s32 %s39, 1
      %s41 = scalar_select %p38, %s39, %s40
      %p44 = pneg %p38
      %p45 = scmp.eq.s32.totalorder %s15, 1
      %p46 = por %p44, %p45
      %p47 = scmp.ne.s32.totalorder %s39, %s42
      %p48 = scmp.eq.s32.totalorder %s15, 0
      %p49 = por %p47, %p48
      %p50 = scmp.ne.s32.totalorder %s39, %s42
      %p51 = scmp.eq.s32.totalorder %s20, 1
      %p52 = por %p50, %p51
      %p53 = scmp.ne.s32.totalorder %s42, %s43
      %p54 = scmp.eq.s32.totalorder %s20, 0
      %p55 = por %p53, %p54
      %p56 = scmp.ne.s32.totalorder %s42, %s43
      %p57 = scmp.eq.s32.totalorder %s21, 1
      %p58 = por %p56, %p57
      %p60 = scmp.ne.s32.totalorder %s43, %s59
      %p61 = scmp.eq.s32.totalorder %s21, 0
      %p62 = por %p60, %p61
      %s64 = sadd.s32 %s63, 1
      %p67 = scmp.eq.s32.totalorder %s15, 1
      %p68 = scmp.ne.s32.totalorder %s63, %s65
      %p69 = scmp.eq.s32.totalorder %s15, 0
      %p70 = por %p68, %p69
      %p71 = scmp.ne.s32.totalorder %s63, %s65
      %p72 = scmp.eq.s32.totalorder %s20, 1
      %p73 = por %p71, %p72
      %p74 = scmp.ne.s32.totalorder %s65, %s66
      %p75 = scmp.eq.s32.totalorder %s20, 0
      %p76 = por %p74, %p75
      %p77 = scmp.ne.s32.totalorder %s65, %s66
      %p78 = scmp.eq.s32.totalorder %s21, 1
      %p79 = por %p77, %p78
      %p81 = scmp.ne.s32.totalorder %s66, %s80
      %p82 = scmp.eq.s32.totalorder %s21, 0
      %p83 = por %p81, %p82
      %s85 = sadd.s32 %s84, 1
      %p88 = scmp.eq.s32.totalorder %s15, 1
      %p89 = scmp.ne.s32.totalorder %s84, %s86
      %p90 = scmp.eq.s32.totalorder %s15, 0
      %p91 = por %p89, %p90
      %p92 = scmp.ne.s32.totalorder %s84, %s86
      %p93 = scmp.eq.s32.totalorder %s20, 1
      %p94 = por %p92, %p93
      %p95 = scmp.ne.s32.totalorder %s86, %s87
      %p96 = scmp.eq.s32.totalorder %s20, 0
      %p97 = por %p95, %p96
      %p98 = scmp.ne.s32.totalorder %s86, %s87
      %p99 = scmp.eq.s32.totalorder %s21, 1
      %p100 = por %p98, %p99
      %p102 = scmp.ne.s32.totalorder %s87, %s101
      %p103 = scmp.eq.s32.totalorder %s21, 0
      %p104 = por %p102, %p103
      %s105 = ssub.s32 %s22, %s34
      %s106 = ssub.s32 %s23, %s30
      %s107 = sor.u32 %s105, %s106
      %p108 = scmp.eq.s32.totalorder %s107, 0
      %s110 = sadd.s32 %s109, 1
      %s111 = scalar_select %p108, %s109, %s110
      %p114 = pneg %p108
      %p115 = scmp.eq.s32.totalorder %s15, 1
      %p116 = por %p114, %p115
      %p117 = scmp.ne.s32.totalorder %s109, %s112
      %p118 = scmp.eq.s32.totalorder %s15, 0
      %p119 = por %p117, %p118
      %p120 = scmp.ne.s32.totalorder %s109, %s112
      %p121 = scmp.eq.s32.totalorder %s20, 1
      %p122 = por %p120, %p121
      %p123 = scmp.ne.s32.totalorder %s112, %s113
      %p124 = scmp.eq.s32.totalorder %s20, 0
      %p125 = por %p123, %p124
      %p126 = scmp.ne.s32.totalorder %s112, %s113
      %p127 = scmp.eq.s32.totalorder %s21, 1
      %p128 = por %p126, %p127
      %p130 = scmp.ne.s32.totalorder %s113, %s129
      %p131 = scmp.eq.s32.totalorder %s21, 0
      %p132 = por %p130, %p131
      %p133 = scmp.le.s32.totalorder 1, %s15
      %p134 = scmp.lt.s32.totalorder %s15, 3
      %p135 = pnand %p133, %p134
      %p136 = pneg %p135
      // Predicated region
      $region9: #{tpu_custom_call.1} parent=5 // pred_check
        _
      $region10: #{tpu_custom_call.1} parent=5 // pred_check_branch
        %138 = sbr.rel (%p135) target = $region12
      $region11: #{tpu_custom_call.1} parent=5 // pred_region
        %s139 = ssub.s32 %s15, 1
        // Predicated region
        $region13: #{tpu_custom_call.1} parent=11 // pred_check
          %p140 = pneg %p76
        $region14: #{tpu_custom_call.1} parent=11 // pred_check_branch
          %142 = sbr.rel (%p140) target = $region16
        $region15: #{tpu_custom_call.1} parent=11 // pred_region
          _
        $region16: #{tpu_custom_call.1} parent=11 // pred_fallthru
          _
        // Predicated region
        $region17: #{tpu_custom_call.1} parent=11 // pred_check
          %p143 = pneg %p97
        $region18: #{tpu_custom_call.1} parent=11 // pred_check_branch
          %145 = sbr.rel (%p143) target = $region20
        $region19: #{tpu_custom_call.1} parent=11 // pred_region
          _
        $region20: #{tpu_custom_call.1} parent=11 // pred_fallthru
          _
      $region12: #{tpu_custom_call.1} parent=5 // pred_fallthru
        _
      %p146 = scmp.lt.s32.totalorder %s15, 2
      // Predicated region
      $region21: #{tpu_custom_call.1} parent=5 // pred_check
        %p147 = pneg %p146
      $region22: #{tpu_custom_call.1} parent=5 // pred_check_branch
        %149 = sbr.rel (%p147) target = $region24
      $region23: #{tpu_custom_call.1} parent=5 // pred_region
        // Predicated region
        $region25: #{tpu_custom_call.1} parent=23 // pred_check
          %p150 = pneg %p49
        $region26: #{tpu_custom_call.1} parent=23 // pred_check_branch
          %152 = sbr.rel (%p150) target = $region28
        $region27: #{tpu_custom_call.1} parent=23 // pred_region
          %s153 = sand.u32 %s39, 1
          %s154 = scalar_lea.sflag [#allocation3], %s153
          %s155 = sand.u32 %s39, 1
          %s156 = smul.addr %s155, 8
          %s157 = scalar_lea.vmem [#allocation2], %s156
          %s158 = smul.u32 2, %s23
          %s160 = ssub.s32 128, 128
          %161 = vsyncadd %s154, %s160
          %s162 = smul.addr %s22, 2
          %s163 = sadd.s32 %s158, %s162
          %s164 = smul.addr %s163, 64
          %s165 = scalar_lea.hbm %s0, %s164
          %s167 = sshll.u32 %s157, 4
          %s168 = int_to_ptr.vmem [resolvable:$true] %s167
          %170 = dma.hbm_to_vmem [thread:$0]  %s165, 128, %s168, %s154
        $region28: #{tpu_custom_call.1} parent=23 // pred_fallthru
          _
      $region24: #{tpu_custom_call.1} parent=5 // pred_fallthru
        _
      %p171 = scmp.le.s32.totalorder 1, %s15
      %p172 = scmp.lt.s32.totalorder %s15, 3
      %p173 = pnand %p171, %p172
      %p174 = pneg %p173
      // Predicated region
      $region29: #{tpu_custom_call.1} parent=5 // pred_check
        _
      $region30: #{tpu_custom_call.1} parent=5 // pred_check_branch
        %176 = sbr.rel (%p173) target = $region32
      $region31: #{tpu_custom_call.1} parent=5 // pred_region
        %s177 = ssub.s32 %s15, 1
        %s178 = sand.u32 %s42, 1
        %s179 = scalar_lea.sflag [#allocation3], %s178
        %s180 = sand.u32 %s42, 1
        %s181 = smul.addr %s180, 8
        %s182 = scalar_lea.vmem [#allocation2], %s181
        // Predicated region
        $region33: #{tpu_custom_call.1} parent=31 // pred_check
          %p183 = pneg %p55
        $region34: #{tpu_custom_call.1} parent=31 // pred_check_branch
          %185 = sbr.rel (%p183) target = $region36
        $region35: #{tpu_custom_call.1} parent=31 // pred_region
          %186 = dma.done %s179, 128
        $region36: #{tpu_custom_call.1} parent=31 // pred_fallthru
          _
        %s187 = sand.u32 %s42, 1
        %s188 = scalar_lea.sflag [#allocation3], %s187
        %s189 = sand.u32 %s42, 1
        %s190 = smul.addr %s189, 8
        %s191 = scalar_lea.vmem [#allocation2], %s190
        %p192 = pneg %p55
        %p193 = pneg %p52
        %p194 = pneg %p76
        %p195 = pneg %p73
        %p196 = pneg %p97
        %p197 = pneg %p94
        %p198 = pneg %p125
        %p199 = pneg %p122
        %s200 = sand.u32 %s112, 1
        %s201 = scalar_lea.sflag [#allocation4], %s200
        %s202 = sand.u32 %s112, 1
        %s203 = smul.addr %s202, 8
        %s204 = scalar_lea.vmem [#allocation5], %s203
        %s205 = smul.u32 2, %s25
        %s206 = smul.u32 2, %s25
        %v207 = vld [vmem:[%s182] sm:$0xff]
        %v208 = vld [vmem:[%s1] sm:$0xf]
        %v209 = vld [vmem:[%s2] sm:$0xf]
        %v211 = vcombine.high %v207, %v207
        %vm213 = vcmask 1043456
        %v214 = vsel %vm213, %v207, 0.0
        %v215 = vrot.slane %v214, 4
        %v216 = vadd.f32 %v214, %v215
        %v217 = vrot.slane %v216, 2
        %v218 = vadd.f32 %v216, %v217
        %v219 = vrot.slane %v218, 1
        %v220 = vadd.f32 %v218, %v219
        %v221 = vsel %vm213, %v211, 0.0
        %v222 = vrot.slane %v221, 4
        %v223 = vadd.f32 %v221, %v222
        %v224 = vrot.slane %v223, 2
        %v225 = vadd.f32 %v223, %v224
        %v226 = vrot.slane %v225, 1
        %v227 = vadd.f32 %v225, %v226
        %v228 = vrcp.pop 4.0
        %v229 = vmul.f32 %v220, %v228
        %v230 = vmul.f32 %v227, %v228
        %v233 = vcombine.low %v229, %v230
        %v235 = vsub.f32 %v207, %v233
        %v236 = vmul.f32 %v235, %v235
        %v238 = vcombine.high %v236, %v236
        %v240 = vsel %vm213, %v236, 0.0
        %v241 = vrot.slane %v240, 4
        %v242 = vadd.f32 %v240, %v241
        %v243 = vrot.slane %v242, 2
        %v244 = vadd.f32 %v242, %v243
        %v245 = vrot.slane %v244, 1
        %v246 = vadd.f32 %v244, %v245
        %v247 = vsel %vm213, %v238, 0.0
        %v248 = vrot.slane %v247, 4
        %v249 = vadd.f32 %v247, %v248
        %v250 = vrot.slane %v249, 2
        %v251 = vadd.f32 %v249, %v250
        %v252 = vrot.slane %v251, 1
        %v253 = vadd.f32 %v251, %v252
        %v254 = vmul.f32 %v246, %v228
        %v255 = vmul.f32 %v253, %v228
        %v256 = vadd.f32 %v254, 1e-05
        %v257 = vadd.f32 %v255, 1e-05
        %v258 = vrsqrt.pop %v256
        %v259 = vrsqrt.pop %v257
        %261 = vset.pattern.permute.xlu0 0
        %262 = vperm.xlu0 %261, %v208
        %v263 = vpop.permute.xlu0 %262
        %v265 = vmul.f32 %v263, %v258
        %v266 = vmul.f32 %v263, %v259
        %v269 = vcombine.low %v265, %v266
        %v271 = vmul.f32 %v235, %v269
        %273 = vset.pattern.permute.xlu0 0
        %274 = vperm.xlu0 %273, %v209
        %v275 = vpop.permute.xlu0 %274
        %v277 = vunpack.c.l.s4 839922192
        %v278 = vunpack.c.0.s8 %v277
        %v279 = vlaneseq
        %v280 = vshrl.u32 %v279, 7
        %v281 = vsub.s32 %v278, %v280
        %v282 = vrot.slane %v275, %v281
        %v284 = vadd.f32 %v271, %v282
        %285 = vst [vmem:[%s204] sm:$0xff] %v284
        %s286 = sand.u32 %s112, 1
        %s287 = scalar_lea.sflag [#allocation4], %s286
        %s288 = sand.u32 %s112, 1
        %s289 = smul.addr %s288, 8
        %s290 = scalar_lea.vmem [#allocation5], %s289
        // Predicated region
        $region37: #{tpu_custom_call.1} parent=31 // pred_check
          %p291 = pneg %p122
        $region38: #{tpu_custom_call.1} parent=31 // pred_check_branch
          %293 = sbr.rel (%p291) target = $region40
        $region39: #{tpu_custom_call.1} parent=31 // pred_region
          %s294 = smul.u32 2, %s25
          %s296 = ssub.s32 128, 128
          %297 = vsyncadd %s287, %s296
          %s298 = smul.addr %s24, 2
          %s299 = sadd.s32 %s294, %s298
          %s300 = smul.addr %s299, 64
          %s301 = scalar_lea.hbm %s3, %s300
          %s303 = sshll.u32 %s290, 4
          %s304 = int_to_ptr.vmem [resolvable:$true] %s303
          %306 = dma.vmem_to_hbm [thread:$0]  %s304, 128, %s301, %s287
        $region40: #{tpu_custom_call.1} parent=31 // pred_fallthru
          _
      $region32: #{tpu_custom_call.1} parent=5 // pred_fallthru
        _
      %p307 = scmp.le.s32.totalorder 2, %s15
      // Predicated region
      $region41: #{tpu_custom_call.1} parent=5 // pred_check
        %p308 = pneg %p307
      $region42: #{tpu_custom_call.1} parent=5 // pred_check_branch
        %310 = sbr.rel (%p308) target = $region44
      $region43: #{tpu_custom_call.1} parent=5 // pred_region
        %s311 = ssub.s32 %s15, 2
        // Predicated region
        $region45: #{tpu_custom_call.1} parent=43 // pred_check
          %p312 = pneg %p128
        $region46: #{tpu_custom_call.1} parent=43 // pred_check_branch
          %314 = sbr.rel (%p312) target = $region48
        $region47: #{tpu_custom_call.1} parent=43 // pred_region
          %s315 = sand.u32 %s113, 1
          %s316 = scalar_lea.sflag [#allocation4], %s315
          %s317 = sand.u32 %s113, 1
          %s318 = smul.addr %s317, 8
          %s319 = scalar_lea.vmem [#allocation5], %s318
          %320 = dma.done %s316, 128
        $region48: #{tpu_custom_call.1} parent=43 // pred_fallthru
          _
      $region44: #{tpu_custom_call.1} parent=5 // pred_fallthru
        _
    $region6: #{tpu_custom_call.1} parent=1 // loop_footer
      %s19 = sadd.s32 1, %s15
    $region7: #{tpu_custom_call.1} parent=1 // loop_footer_branch
      %14 = sbr.rel target = $region3
    $region8: #{tpu_custom_call.1} parent=1 // loop_exit
      _
    %321 = vsyncpa [#allocation3], 1
    %s322 = scalar_lea.sflag [#allocation3], 1
    %323 = vsyncpa %s322, 1
    %324 = vsyncpa [#allocation4], 1
    %s325 = scalar_lea.sflag [#allocation4], 1
    %326 = vsyncpa %s325, 1

</llo_original>
